<compile_context>
chip_gen: v7x
topology: tpu7x:2x2x1
jax: 0.10.0
libtpu: 0.0.40
codegen_flags: <defaults>
</compile_context>

<pallas_src>
import jax
import jax.numpy as jnp
from jax import lax
from jax.experimental import pallas as pl
from jax.experimental.pallas import tpu as pltpu


def make_gc_dec_kernel(alpha: float):
    inv_alpha = 1.0 / alpha          # folded at trace time
    power = alpha + 1.0
    eps_q = 1e-8

    def kernel(x_ref, adj_ref, w_ref, b_ref, mu_ref, z_ref, q_ref):
        # GraphConvolution for this row tile:
        #   support = x @ W   (full x, tiny W -> MXU)
        #   z_tile  = adj_tile @ support + b
        support = jnp.dot(x_ref[...], w_ref[...],
                          preferred_element_type=jnp.float32)
        z = jnp.dot(adj_ref[...], support,
                    preferred_element_type=jnp.float32) + b_ref[...]
        z_ref[...] = z.astype(z_ref.dtype)

        # Student-t soft assignment, expanded squared distance on the MXU:
        #   dist2 = ||z||^2 + ||mu||^2 - 2 z @ mu.T
        mu = mu_ref[...]                                         # (K, H)
        z_sq = jnp.sum(z * z, axis=1, keepdims=True)             # (TM, 1)
        mu_sq = jnp.sum(mu * mu, axis=1)[None, :]                # (1, K)
        cross = lax.dot_general(z, mu,
                                dimension_numbers=(((1,), (1,)), ((), ())),
                                preferred_element_type=jnp.float32)  # (TM, K)
        dist2 = jnp.maximum(z_sq + mu_sq - 2.0 * cross, 0.0)

        # q = (1 + dist2/alpha + eps)^-(alpha+1); the original /2.0 cancels in
        # the row normalization and is dropped as dead work.
        base = 1.0 + dist2 * inv_alpha + eps_q
        q = pl.reciprocal(base, approx=False) ** power
        rowsum = jnp.sum(q, axis=1, keepdims=True)
        q = q * pl.reciprocal(rowsum, approx=False)
        q_ref[...] = q.astype(q_ref.dtype)

    return kernel


def simple_gc_dec_forward(x, adj, w, b, mu, alpha=0.2, row_block=128):
    N, F = x.shape
    H = w.shape[1]
    K = mu.shape[0]

    # Row tile over nodes (multiple of 8 for sublane alignment).
    TM = min(row_block, N)
    grid = (pl.cdiv(N, TM),)

    kernel = make_gc_dec_kernel(alpha)

    z, q = pl.pallas_call(
        kernel,
        out_shape=(
            jax.ShapeDtypeStruct((N, H), jnp.float32),
            jax.ShapeDtypeStruct((N, K), jnp.float32),
        ),
        grid=grid,
        in_specs=[
            pl.BlockSpec((N, F), lambda i: (0, 0)),    # x  (full)
            pl.BlockSpec((TM, N), lambda i: (i, 0)),   # adj row tile
            pl.BlockSpec((F, H), lambda i: (0, 0)),    # W
            pl.BlockSpec((1, H), lambda i: (0, 0)),    # b
            pl.BlockSpec((K, H), lambda i: (0, 0)),    # mu
        ],
        out_specs=(
            pl.BlockSpec((TM, H), lambda i: (i, 0)),   # z row tile
            pl.BlockSpec((TM, K), lambda i: (i, 0)),   # q row tile
        ),
        compiler_params=pltpu.CompilerParams(
            dimension_semantics=("parallel",),
        ),
    )(x, adj, w, b, mu)
    return z, q


def reference_forward(x, adj, w, b, mu, alpha=0.2):
    z = adj @ (x @ w) + b
    dist2 = jnp.sum((z[:, None, :] - mu[None, :, :]) ** 2, axis=2)
    q = 1.0 / (1.0 + dist2 / alpha + 1e-8)
    q = q ** (alpha + 1.0) / 2.0
    q = q / jnp.sum(q, axis=1, keepdims=True)
    return z, q


if __name__ == "__main__":
    # Small deterministic problem: N nodes (2 row tiles), nfeat input features,
    # nhid hidden dim, K cluster centers.
    N, nfeat, nhid, K = 256, 64, 32, 8
    alpha = 0.2

    key = jax.random.PRNGKey(0)
    kx, kadj, kw, kb, kmu = jax.random.split(key, 5)

    x = jax.random.normal(kx, (N, nfeat), dtype=jnp.float32)

    # Symmetric row-normalized adjacency with self loops (dense).
    a = jax.random.uniform(kadj, (N, N), dtype=jnp.float32)
    a = (a + a.T) / 2.0 + jnp.eye(N, dtype=jnp.float32)
    adj = a / jnp.sum(a, axis=1, keepdims=True)

    # GraphConvolution parameters (uniform init like PyTorch stdv).
    stdv = 1.0 / jnp.sqrt(jnp.float32(nhid))
    w = jax.random.uniform(kw, (nfeat, nhid), dtype=jnp.float32,
                           minval=-stdv, maxval=stdv)
    b = jax.random.uniform(kb, (1, nhid), dtype=jnp.float32,
                           minval=-stdv, maxval=stdv)

    # Cluster centers mu (normally set by fit(); synthetic init here).
    mu = jax.random.normal(kmu, (K, nhid), dtype=jnp.float32)

    z, q = simple_gc_dec_forward(x, adj, w, b, mu, alpha=alpha)
    jax.block_until_ready((z, q))

    z_ref, q_ref = reference_forward(x, adj, w, b, mu, alpha=alpha)

    assert z.shape == (N, nhid) and q.shape == (N, K)
    assert jnp.allclose(z, z_ref, atol=1e-4, rtol=1e-4)
    assert jnp.allclose(q, q_ref, atol=1e-5, rtol=1e-4)
    # q rows sum to 1
    assert jnp.allclose(jnp.sum(q, axis=1), jnp.ones((N,)), atol=1e-5)

    print("KERNEL_OK")
</pallas_src>

<mosaic_0001>
module attributes {stable_mosaic.version = 11 : i64} {
  func.func @kernel(%arg0: i32, %arg1: memref<256x64xf32, #tpu.memory_space<vmem>>, %arg2: memref<128x256xf32, #tpu.memory_space<vmem>>, %arg3: memref<64x32xf32, #tpu.memory_space<vmem>>, %arg4: memref<1x32xf32, #tpu.memory_space<vmem>>, %arg5: memref<8x32xf32, #tpu.memory_space<vmem>>, %arg6: memref<128x32xf32, #tpu.memory_space<vmem>>, %arg7: memref<128x8xf32, #tpu.memory_space<vmem>>) attributes {dimension_semantics = [#tpu.dimension_semantics<parallel>], iteration_bounds = array<i64: 2>, scalar_prefetch = 0 : i64, scratch_operands = 0 : i64, tpu.core_type = #tpu.core_type<tc>, window_params = [{pipeline_mode = #tpu.pipeline_mode<synchronous>, transform_indices = @transform_0, window_bounds = array<i64: 256, 64>}, {transform_indices = @transform_1, window_bounds = array<i64: 128, 256>}, {pipeline_mode = #tpu.pipeline_mode<synchronous>, transform_indices = @transform_2, window_bounds = array<i64: 64, 32>}, {pipeline_mode = #tpu.pipeline_mode<synchronous>, transform_indices = @transform_3, window_bounds = array<i64: 1, 32>}, {pipeline_mode = #tpu.pipeline_mode<synchronous>, transform_indices = @transform_4, window_bounds = array<i64: 8, 32>}, {transform_indices = @transform_5, window_bounds = array<i64: 128, 32>}, {transform_indices = @transform_6, window_bounds = array<i64: 128, 8>}]} {
    %c0 = arith.constant 0 : index
    %c0_0 = arith.constant 0 : index
    %0 = vector.load %arg1[%c0, %c0_0] : memref<256x64xf32, #tpu.memory_space<vmem>>, vector<256x64xf32>
    %c0_1 = arith.constant 0 : index
    %c0_2 = arith.constant 0 : index
    %1 = vector.load %arg3[%c0_1, %c0_2] : memref<64x32xf32, #tpu.memory_space<vmem>>, vector<64x32xf32>
    %cst = arith.constant dense<0.000000e+00> : vector<256x32xf32>
    %2 = tpu.matmul %0, %1, %cst {dimension_numbers = #tpu.dot_dimension_numbers<[1], [0], [0], [1], [0, 0, 1, 1], [], []>} : vector<256x64xf32>, vector<64x32xf32>, vector<256x32xf32> -> vector<256x32xf32>
    %c0_3 = arith.constant 0 : index
    %c0_4 = arith.constant 0 : index
    %3 = vector.load %arg2[%c0_3, %c0_4] : memref<128x256xf32, #tpu.memory_space<vmem>>, vector<128x256xf32>
    %cst_5 = arith.constant dense<0.000000e+00> : vector<128x32xf32>
    %4 = tpu.matmul %3, %2, %cst_5 {dimension_numbers = #tpu.dot_dimension_numbers<[1], [0], [0], [1], [0, 0, 1, 1], [], []>} : vector<128x256xf32>, vector<256x32xf32>, vector<128x32xf32> -> vector<128x32xf32>
    %c0_6 = arith.constant 0 : index
    %c0_7 = arith.constant 0 : index
    %5 = vector.load %arg4[%c0_6, %c0_7] : memref<1x32xf32, #tpu.memory_space<vmem>>, vector<1x32xf32>
    %6 = vector.broadcast %5 : vector<1x32xf32> to vector<128x32xf32>
    %7 = arith.addf %4, %6 : vector<128x32xf32>
    %c0_8 = arith.constant 0 : index
    %c0_9 = arith.constant 0 : index
    %8 = vector.load %arg6[%c0_8, %c0_9] : memref<128x32xf32, #tpu.memory_space<vmem>>, vector<128x32xf32>
    tpu.vector_store %arg6[%c0_8, %c0_9], %7 {strides = array<i32>} : memref<128x32xf32, #tpu.memory_space<vmem>>, vector<128x32xf32>,
    %c0_10 = arith.constant 0 : index
    %c0_11 = arith.constant 0 : index
    %9 = vector.load %arg5[%c0_10, %c0_11] : memref<8x32xf32, #tpu.memory_space<vmem>>, vector<8x32xf32>
    %10 = arith.mulf %7, %7 : vector<128x32xf32>
    %cst_12 = arith.constant dense<0.000000e+00> : vector<128xf32>
    %11 = vector.multi_reduction <add>, %10, %cst_12 [1] : vector<128x32xf32> to vector<128xf32>
    %12 = vector.shape_cast %11 : vector<128xf32> to vector<128x1xf32>
    %13 = arith.mulf %9, %9 : vector<8x32xf32>
    %cst_13 = arith.constant dense<0.000000e+00> : vector<8xf32>
    %14 = vector.multi_reduction <add>, %13, %cst_13 [1] : vector<8x32xf32> to vector<8xf32>
    %15 = vector.shape_cast %14 : vector<8xf32> to vector<1x8xf32>
    %cst_14 = arith.constant dense<0.000000e+00> : vector<128x8xf32>
    %16 = tpu.matmul %7, %9, %cst_14 {dimension_numbers = #tpu.dot_dimension_numbers<[1], [1], [0], [0], [0, 0, 1, 0], [], []>} : vector<128x32xf32>, vector<8x32xf32>, vector<128x8xf32> -> vector<128x8xf32>
    %17 = vector.broadcast %12 : vector<128x1xf32> to vector<128x8xf32>
    %18 = vector.broadcast %15 : vector<1x8xf32> to vector<128x8xf32>
    %19 = arith.addf %17, %18 : vector<128x8xf32>
    %cst_15 = arith.constant 2.000000e+00 : f32
    %20 = vector.broadcast %cst_15 : f32 to vector<128x8xf32>
    %21 = arith.mulf %20, %16 : vector<128x8xf32>
    %22 = arith.subf %19, %21 : vector<128x8xf32>
    %cst_16 = arith.constant 0.000000e+00 : f32
    %23 = vector.broadcast %cst_16 : f32 to vector<128x8xf32>
    %24 = arith.maximumf %22, %23 : vector<128x8xf32>
    %cst_17 = arith.constant 5.000000e+00 : f32
    %25 = vector.broadcast %cst_17 : f32 to vector<128x8xf32>
    %26 = arith.mulf %24, %25 : vector<128x8xf32>
    %cst_18 = arith.constant 1.000000e+00 : f32
    %27 = vector.broadcast %cst_18 : f32 to vector<128x8xf32>
    %28 = arith.addf %27, %26 : vector<128x8xf32>
    %cst_19 = arith.constant 9.99999993E-9 : f32
    %29 = vector.broadcast %cst_19 : f32 to vector<128x8xf32>
    %30 = arith.addf %28, %29 : vector<128x8xf32>
    %31 = tpu.reciprocal %30 : vector<128x8xf32> -> vector<128x8xf32>
    %cst_20 = arith.constant 1.200000e+00 : f32
    %32 = vector.broadcast %cst_20 : f32 to vector<128x8xf32>
    %33 = math.powf %31, %32 : vector<128x8xf32>
    %cst_21 = arith.constant dense<0.000000e+00> : vector<128xf32>
    %34 = vector.multi_reduction <add>, %33, %cst_21 [1] : vector<128x8xf32> to vector<128xf32>
    %35 = vector.shape_cast %34 : vector<128xf32> to vector<128x1xf32>
    %36 = tpu.reciprocal %35 : vector<128x1xf32> -> vector<128x1xf32>
    %37 = vector.broadcast %36 : vector<128x1xf32> to vector<128x8xf32>
    %38 = arith.mulf %33, %37 : vector<128x8xf32>
    %c0_22 = arith.constant 0 : index
    %c0_23 = arith.constant 0 : index
    %39 = vector.load %arg7[%c0_22, %c0_23] : memref<128x8xf32, #tpu.memory_space<vmem>>, vector<128x8xf32>
    tpu.vector_store %arg7[%c0_22, %c0_23], %38 {strides = array<i32>} : memref<128x8xf32, #tpu.memory_space<vmem>>, vector<128x8xf32>,
    return
  }
  func.func @transform_0(%arg0: i32) -> (i32, i32) {
    %c0_i32 = arith.constant 0 : i32
    %c0_i32_0 = arith.constant 0 : i32
    %c0_i32_1 = arith.constant 0 : i32
    return %c0_i32, %c0_i32_0 : i32, i32
  }
  func.func @transform_1(%arg0: i32) -> (i32, i32) {
    %c0_i32 = arith.constant 0 : i32
    %c0_i32_0 = arith.constant 0 : i32
    return %arg0, %c0_i32 : i32, i32
  }
  func.func @transform_2(%arg0: i32) -> (i32, i32) {
    %c0_i32 = arith.constant 0 : i32
    %c0_i32_0 = arith.constant 0 : i32
    %c0_i32_1 = arith.constant 0 : i32
    return %c0_i32, %c0_i32_0 : i32, i32
  }
  func.func @transform_3(%arg0: i32) -> (i32, i32) {
    %c0_i32 = arith.constant 0 : i32
    %c0_i32_0 = arith.constant 0 : i32
    %c0_i32_1 = arith.constant 0 : i32
    return %c0_i32, %c0_i32_0 : i32, i32
  }
  func.func @transform_4(%arg0: i32) -> (i32, i32) {
    %c0_i32 = arith.constant 0 : i32
    %c0_i32_0 = arith.constant 0 : i32
    %c0_i32_1 = arith.constant 0 : i32
    return %c0_i32, %c0_i32_0 : i32, i32
  }
  func.func @transform_5(%arg0: i32) -> (i32, i32) {
    %c0_i32 = arith.constant 0 : i32
    %c0_i32_0 = arith.constant 0 : i32
    return %arg0, %c0_i32 : i32, i32
  }
  func.func @transform_6(%arg0: i32) -> (i32, i32) {
    %c0_i32 = arith.constant 0 : i32
    %c0_i32_0 = arith.constant 0 : i32
    return %arg0, %c0_i32 : i32, i32
  }
}

</mosaic_0001>

<llo_original>
// kernel: tpu_custom_call.1
$region0: #{tpu_custom_call.1}
  #allocation0 [shape = 'u32[]', space=smem, size = 0x4, offset = 0x4, fixed_abs, tag = 'smem constant byte address 0x4 - core index']
  #allocation1 [shape = 'u32[144,128]{1,0:T(1,128)}', space=vmem, size = 0x12000, scoped, tag = 'internal scratch']
  %s0 = inlined_call_operand.vmem [shape: f32[256,64], index: 0, kind: input, shape index: {}]
  %s1 = inlined_call_operand.hbm [shape: f32[256,256], index: 1, kind: input, shape index: {}]
  %s2 = inlined_call_operand.vmem [shape: f32[64,32], index: 2, kind: input, shape index: {}]
  %s3 = inlined_call_operand.vmem [shape: f32[1,32], index: 3, kind: input, shape index: {}]
  %s4 = inlined_call_operand.vmem [shape: f32[8,32], index: 4, kind: input, shape index: {}]
  %s5 = inlined_call_operand.vmem [shape: f32[256,32], index: 5, kind: output, shape index: {0}]
  %s6 = inlined_call_operand.vmem [shape: f32[256,8], index: 6, kind: output, shape index: {1}]
  %7 = xla_tuple %s5, %s6
  %s8 = sld [smem:[#allocation0]]
  $region65: #{tpu_custom_call.1} parent=0
    _
  %s10 = ssub.s32 1, %s8
  %s11 = scalar_select 0, %s10, %s8
  $region1: #{tpu_custom_call.1} parent=0
    #allocation2 [shape = 'u8[262144]{0}', space=vmem, size = 0x40000, scoped, tag = 'input window, operand 1']
    #allocation3 [shape = 's32[2]{0}', space=sflag, size = 0x8, scoped, tag = 'scoped memory for tpu_custom_call.1']
    %12 = vsyncpa [#allocation3], 0
    %s13 = scalar_lea.sflag [#allocation3], 1
    %14 = vsyncpa %s13, 0
    loop: start=0, step=1, limit=4
    $region2: #{tpu_custom_call.1} parent=1 // loop_pre_header
      _
    $region3: #{tpu_custom_call.1} parent=1 // loop_header
      %s16 = sphi 0, %s20
      %p17 = scmp.ge.s32.totalorder %s16, 4
      %s24 = sphi 0, %s24
      %s26 = sphi 0, %s24
      %s27 = sphi 0, %s26
      %s41 = sphi 0, %s27
      %s47 = sphi 0, %s49
      %s50 = sphi 0, %s47
      %s51 = sphi 0, %s50
      %s67 = sphi 0, %s51
      %s71 = sphi 0, %s71
      %s73 = sphi 0, %s71
      %s74 = sphi 0, %s73
      %s88 = sphi 0, %s74
      %s92 = sphi 0, %s92
      %s94 = sphi 0, %s92
      %s95 = sphi 0, %s94
      %s109 = sphi 0, %s95
      %s113 = sphi 0, %s113
      %s115 = sphi 0, %s113
      %s116 = sphi 0, %s115
      %s130 = sphi 0, %s116
      %s136 = sphi 0, %s138
      %s139 = sphi 0, %s136
      %s140 = sphi 0, %s139
      %s156 = sphi 0, %s140
      %s162 = sphi 0, %s164
      %s165 = sphi 0, %s162
      %s166 = sphi 0, %s165
      %s182 = sphi 0, %s166
    $region4: #{tpu_custom_call.1} parent=1 // loop_header_branch
      %19 = sbr.rel (%p17) target = $region8
    $region5: #{tpu_custom_call.1} parent=1 // loop_body
      %s21 = ssub.s32 %s16, 1
      %s22 = ssub.s32 %s16, 2
      %s23 = sadd.s32 %s16, 1
      %s25 = sadd.s32 %s24, 1
      %p28 = scmp.eq.s32.totalorder %s16, 1
      %p29 = scmp.ne.s32.totalorder %s24, %s26
      %p30 = scmp.eq.s32.totalorder %s16, 0
      %p31 = por %p29, %p30
      %p32 = scmp.ne.s32.totalorder %s24, %s26
      %p33 = scmp.eq.s32.totalorder %s21, 1
      %p34 = por %p32, %p33
      %p35 = scmp.ne.s32.totalorder %s26, %s27
      %p36 = scmp.eq.s32.totalorder %s21, 0
      %p37 = por %p35, %p36
      %p38 = scmp.ne.s32.totalorder %s26, %s27
      %p39 = scmp.eq.s32.totalorder %s22, 1
      %p40 = por %p38, %p39
      %p42 = scmp.ne.s32.totalorder %s27, %s41
      %p43 = scmp.eq.s32.totalorder %s22, 0
      %p44 = por %p42, %p43
      %s45 = ssub.s32 %s16, %s23
      %p46 = scmp.eq.s32.totalorder %s45, 0
      %s48 = sadd.s32 %s47, 1
      %s49 = scalar_select %p46, %s47, %s48
      %p52 = pneg %p46
      %p53 = scmp.eq.s32.totalorder %s16, 1
      %p54 = por %p52, %p53
      %p55 = scmp.ne.s32.totalorder %s47, %s50
      %p56 = scmp.eq.s32.totalorder %s16, 0
      %p57 = por %p55, %p56
      %p58 = scmp.ne.s32.totalorder %s47, %s50
      %p59 = scmp.eq.s32.totalorder %s21, 1
      %p60 = por %p58, %p59
      %p61 = scmp.ne.s32.totalorder %s50, %s51
      %p62 = scmp.eq.s32.totalorder %s21, 0
      %p63 = por %p61, %p62
      %p64 = scmp.ne.s32.totalorder %s50, %s51
      %p65 = scmp.eq.s32.totalorder %s22, 1
      %p66 = por %p64, %p65
      %p68 = scmp.ne.s32.totalorder %s51, %s67
      %p69 = scmp.eq.s32.totalorder %s22, 0
      %p70 = por %p68, %p69
      %s72 = sadd.s32 %s71, 1
      %p75 = scmp.eq.s32.totalorder %s16, 1
      %p76 = scmp.ne.s32.totalorder %s71, %s73
      %p77 = scmp.eq.s32.totalorder %s16, 0
      %p78 = por %p76, %p77
      %p79 = scmp.ne.s32.totalorder %s71, %s73
      %p80 = scmp.eq.s32.totalorder %s21, 1
      %p81 = por %p79, %p80
      %p82 = scmp.ne.s32.totalorder %s73, %s74
      %p83 = scmp.eq.s32.totalorder %s21, 0
      %p84 = por %p82, %p83
      %p85 = scmp.ne.s32.totalorder %s73, %s74
      %p86 = scmp.eq.s32.totalorder %s22, 1
      %p87 = por %p85, %p86
      %p89 = scmp.ne.s32.totalorder %s74, %s88
      %p90 = scmp.eq.s32.totalorder %s22, 0
      %p91 = por %p89, %p90
      %s93 = sadd.s32 %s92, 1
      %p96 = scmp.eq.s32.totalorder %s16, 1
      %p97 = scmp.ne.s32.totalorder %s92, %s94
      %p98 = scmp.eq.s32.totalorder %s16, 0
      %p99 = por %p97, %p98
      %p100 = scmp.ne.s32.totalorder %s92, %s94
      %p101 = scmp.eq.s32.totalorder %s21, 1
      %p102 = por %p100, %p101
      %p103 = scmp.ne.s32.totalorder %s94, %s95
      %p104 = scmp.eq.s32.totalorder %s21, 0
      %p105 = por %p103, %p104
      %p106 = scmp.ne.s32.totalorder %s94, %s95
      %p107 = scmp.eq.s32.totalorder %s22, 1
      %p108 = por %p106, %p107
      %p110 = scmp.ne.s32.totalorder %s95, %s109
      %p111 = scmp.eq.s32.totalorder %s22, 0
      %p112 = por %p110, %p111
      %s114 = sadd.s32 %s113, 1
      %p117 = scmp.eq.s32.totalorder %s16, 1
      %p118 = scmp.ne.s32.totalorder %s113, %s115
      %p119 = scmp.eq.s32.totalorder %s16, 0
      %p120 = por %p118, %p119
      %p121 = scmp.ne.s32.totalorder %s113, %s115
      %p122 = scmp.eq.s32.totalorder %s21, 1
      %p123 = por %p121, %p122
      %p124 = scmp.ne.s32.totalorder %s115, %s116
      %p125 = scmp.eq.s32.totalorder %s21, 0
      %p126 = por %p124, %p125
      %p127 = scmp.ne.s32.totalorder %s115, %s116
      %p128 = scmp.eq.s32.totalorder %s22, 1
      %p129 = por %p127, %p128
      %p131 = scmp.ne.s32.totalorder %s116, %s130
      %p132 = scmp.eq.s32.totalorder %s22, 0
      %p133 = por %p131, %p132
      %s134 = ssub.s32 %s16, %s23
      %p135 = scmp.eq.s32.totalorder %s134, 0
      %s137 = sadd.s32 %s136, 1
      %s138 = scalar_select %p135, %s136, %s137
      %p141 = pneg %p135
      %p142 = scmp.eq.s32.totalorder %s16, 1
      %p143 = por %p141, %p142
      %p144 = scmp.ne.s32.totalorder %s136, %s139
      %p145 = scmp.eq.s32.totalorder %s16, 0
      %p146 = por %p144, %p145
      %p147 = scmp.ne.s32.totalorder %s136, %s139
      %p148 = scmp.eq.s32.totalorder %s21, 1
      %p149 = por %p147, %p148
      %p150 = scmp.ne.s32.totalorder %s139, %s140
      %p151 = scmp.eq.s32.totalorder %s21, 0
      %p152 = por %p150, %p151
      %p153 = scmp.ne.s32.totalorder %s139, %s140
      %p154 = scmp.eq.s32.totalorder %s22, 1
      %p155 = por %p153, %p154
      %p157 = scmp.ne.s32.totalorder %s140, %s156
      %p158 = scmp.eq.s32.totalorder %s22, 0
      %p159 = por %p157, %p158
      %s160 = ssub.s32 %s16, %s23
      %p161 = scmp.eq.s32.totalorder %s160, 0
      %s163 = sadd.s32 %s162, 1
      %s164 = scalar_select %p161, %s162, %s163
      %p167 = pneg %p161
      %p168 = scmp.eq.s32.totalorder %s16, 1
      %p169 = por %p167, %p168
      %p170 = scmp.ne.s32.totalorder %s162, %s165
      %p171 = scmp.eq.s32.totalorder %s16, 0
      %p172 = por %p170, %p171
      %p173 = scmp.ne.s32.totalorder %s162, %s165
      %p174 = scmp.eq.s32.totalorder %s21, 1
      %p175 = por %p173, %p174
      %p176 = scmp.ne.s32.totalorder %s165, %s166
      %p177 = scmp.eq.s32.totalorder %s21, 0
      %p178 = por %p176, %p177
      %p179 = scmp.ne.s32.totalorder %s165, %s166
      %p180 = scmp.eq.s32.totalorder %s22, 1
      %p181 = por %p179, %p180
      %p183 = scmp.ne.s32.totalorder %s166, %s182
      %p184 = scmp.eq.s32.totalorder %s22, 0
      %p185 = por %p183, %p184
      %p186 = scmp.le.s32.totalorder 1, %s16
      %p187 = scmp.lt.s32.totalorder %s16, 3
      %p188 = pnand %p186, %p187
      %p189 = pneg %p188
      // Predicated region
      $region9: #{tpu_custom_call.1} parent=5 // pred_check
        _
      $region10: #{tpu_custom_call.1} parent=5 // pred_check_branch
        %191 = sbr.rel (%p188) target = $region12
      $region11: #{tpu_custom_call.1} parent=5 // pred_region
        %s192 = ssub.s32 %s16, 1
        // Predicated region
        $region13: #{tpu_custom_call.1} parent=11 // pred_check
          %p193 = pneg %p37
        $region14: #{tpu_custom_call.1} parent=11 // pred_check_branch
          %195 = sbr.rel (%p193) target = $region16
        $region15: #{tpu_custom_call.1} parent=11 // pred_region
          _
        $region16: #{tpu_custom_call.1} parent=11 // pred_fallthru
          _
        // Predicated region
        $region17: #{tpu_custom_call.1} parent=11 // pred_check
          %p196 = pneg %p84
        $region18: #{tpu_custom_call.1} parent=11 // pred_check_branch
          %198 = sbr.rel (%p196) target = $region20
        $region19: #{tpu_custom_call.1} parent=11 // pred_region
          _
        $region20: #{tpu_custom_call.1} parent=11 // pred_fallthru
          _
        // Predicated region
        $region21: #{tpu_custom_call.1} parent=11 // pred_check
          %p199 = pneg %p105
        $region22: #{tpu_custom_call.1} parent=11 // pred_check_branch
          %201 = sbr.rel (%p199) target = $region24
        $region23: #{tpu_custom_call.1} parent=11 // pred_region
          _
        $region24: #{tpu_custom_call.1} parent=11 // pred_fallthru
          _
        // Predicated region
        $region25: #{tpu_custom_call.1} parent=11 // pred_check
          %p202 = pneg %p126
        $region26: #{tpu_custom_call.1} parent=11 // pred_check_branch
          %204 = sbr.rel (%p202) target = $region28
        $region27: #{tpu_custom_call.1} parent=11 // pred_region
          _
        $region28: #{tpu_custom_call.1} parent=11 // pred_fallthru
          _
      $region12: #{tpu_custom_call.1} parent=5 // pred_fallthru
        _
      %p205 = scmp.lt.s32.totalorder %s16, 2
      // Predicated region
      $region29: #{tpu_custom_call.1} parent=5 // pred_check
        %p206 = pneg %p205
      $region30: #{tpu_custom_call.1} parent=5 // pred_check_branch
        %208 = sbr.rel (%p206) target = $region32
      $region31: #{tpu_custom_call.1} parent=5 // pred_region
        // Predicated region
        $region33: #{tpu_custom_call.1} parent=31 // pred_check
          %p209 = pneg %p57
        $region34: #{tpu_custom_call.1} parent=31 // pred_check_branch
          %211 = sbr.rel (%p209) target = $region36
        $region35: #{tpu_custom_call.1} parent=31 // pred_region
          %s212 = sand.u32 %s47, 1
          %s213 = scalar_lea.sflag [#allocation3], %s212
          %s214 = sand.u32 %s47, 1
          %s215 = smul.addr %s214, 256
          %s216 = scalar_lea.vmem [#allocation2], %s215
          %s217 = smul.u32 16, %s16
          %s219 = ssub.s32 4096, 4096
          %220 = vsyncadd %s213, %s219
          %s221 = smul.addr %s217, 2
          %s222 = smul.addr %s221, 128
          %s223 = scalar_lea.hbm %s1, %s222
          %s224 = sshll.u32 %s216, 4
          %s225 = int_to_ptr.vmem [resolvable:$true] %s224
          %230 = dma.hbm_to_vmem [thread:$0]  %s223, 4096, %s225, %s213, 256, 256, 16
        $region36: #{tpu_custom_call.1} parent=31 // pred_fallthru
          _
      $region32: #{tpu_custom_call.1} parent=5 // pred_fallthru
        _
      %p231 = scmp.le.s32.totalorder 1, %s16
      %p232 = scmp.lt.s32.totalorder %s16, 3
      %p233 = pnand %p231, %p232
      %p234 = pneg %p233
      // Predicated region
      $region37: #{tpu_custom_call.1} parent=5 // pred_check
        _
      $region38: #{tpu_custom_call.1} parent=5 // pred_check_branch
        %236 = sbr.rel (%p233) target = $region40
      $region39: #{tpu_custom_call.1} parent=5 // pred_region
        %s237 = ssub.s32 %s16, 1
        %s238 = sand.u32 %s50, 1
        %s239 = scalar_lea.sflag [#allocation3], %s238
        %s240 = sand.u32 %s50, 1
        %s241 = smul.addr %s240, 256
        %s242 = scalar_lea.vmem [#allocation2], %s241
        // Predicated region
        $region41: #{tpu_custom_call.1} parent=39 // pred_check
          %p243 = pneg %p63
        $region42: #{tpu_custom_call.1} parent=39 // pred_check_branch
          %245 = sbr.rel (%p243) target = $region44
        $region43: #{tpu_custom_call.1} parent=39 // pred_region
          %246 = dma.done %s239, 4096
        $region44: #{tpu_custom_call.1} parent=39 // pred_fallthru
          _
        %p247 = pneg %p37
        %p248 = pneg %p34
        %s249 = sand.u32 %s50, 1
        %s250 = scalar_lea.sflag [#allocation3], %s249
        %s251 = sand.u32 %s50, 1
        %s252 = smul.addr %s251, 256
        %s253 = scalar_lea.vmem [#allocation2], %s252
        %p254 = pneg %p63
        %p255 = pneg %p60
        %p256 = pneg %p84
        %p257 = pneg %p81
        %p258 = pneg %p105
        %p259 = pneg %p102
        %p260 = pneg %p126
        %p261 = pneg %p123
        %p262 = pneg %p152
        %p263 = pneg %p149
        %s264 = smul.u32 16, %s21
        %p265 = scmp.lt.s32.totalorder %s264, 31
        %s266 = scalar_select %p265, %s264, 31
        %s267 = smul.addr %s266, 8
        %s268 = scalar_lea.vmem %s5, %s267
        %p269 = pneg %p178
        %p270 = pneg %p175
        %s271 = smul.u32 16, %s21
        %p272 = scmp.lt.s32.totalorder %s271, 31
        %s273 = scalar_select %p272, %s271, 31
        %s274 = smul.addr %s273, 8
        %s275 = scalar_lea.vmem %s6, %s274
        %s276 = smul.u32 16, %s21
        %s277 = smul.u32 16, %s21
        %p278 = scmp.lt.s32.totalorder %s277, 31
        %s279 = scalar_select %p278, %s277, 31
        %s280 = smul.addr %s279, 8
        %s281 = scalar_lea.vmem %s5, %s280
        %s282 = smul.u32 16, %s21
        %s283 = smul.u32 16, %s21
        %p284 = scmp.lt.s32.totalorder %s283, 31
        %s285 = scalar_select %p284, %s283, 31
        %s286 = smul.addr %s285, 8
        %s287 = scalar_lea.vmem %s6, %s286
        %s288 = smul.u32 16, %s21
        %v289 = vld [vmem:[%s0] sm:$0xff]
        %v290 = vld [vmem:[%s0 + $0x8] sm:$0xff]
        %v291 = vld [vmem:[%s0 + $0x10] sm:$0xff]
        %v292 = vld [vmem:[%s0 + $0x18] sm:$0xff]
        %v293 = vld [vmem:[%s0 + $0x20] sm:$0xff]
        %v294 = vld [vmem:[%s0 + $0x28] sm:$0xff]
        %v295 = vld [vmem:[%s0 + $0x30] sm:$0xff]
        %v296 = vld [vmem:[%s0 + $0x38] sm:$0xff]
        %v297 = vld [vmem:[%s0 + $0x40] sm:$0xff]
        %v298 = vld [vmem:[%s0 + $0x48] sm:$0xff]
        %v299 = vld [vmem:[%s0 + $0x50] sm:$0xff]
        %v300 = vld [vmem:[%s0 + $0x58] sm:$0xff]
        %v301 = vld [vmem:[%s0 + $0x60] sm:$0xff]
        %v302 = vld [vmem:[%s0 + $0x68] sm:$0xff]
        %v303 = vld [vmem:[%s0 + $0x70] sm:$0xff]
        %v304 = vld [vmem:[%s0 + $0x78] sm:$0xff]
        %v305 = vld [vmem:[%s0 + $0x80] sm:$0xff]
        %v306 = vld [vmem:[%s0 + $0x88] sm:$0xff]
        %v307 = vld [vmem:[%s0 + $0x90] sm:$0xff]
        %v308 = vld [vmem:[%s0 + $0x98] sm:$0xff]
        %v309 = vld [vmem:[%s0 + $0xa0] sm:$0xff]
        %v310 = vld [vmem:[%s0 + $0xa8] sm:$0xff]
        %v311 = vld [vmem:[%s0 + $0xb0] sm:$0xff]
        %v312 = vld [vmem:[%s0 + $0xb8] sm:$0xff]
        %v313 = vld [vmem:[%s0 + $0xc0] sm:$0xff]
        %v314 = vld [vmem:[%s0 + $0xc8] sm:$0xff]
        %v315 = vld [vmem:[%s0 + $0xd0] sm:$0xff]
        %v316 = vld [vmem:[%s0 + $0xd8] sm:$0xff]
        %v317 = vld [vmem:[%s0 + $0xe0] sm:$0xff]
        %v318 = vld [vmem:[%s0 + $0xe8] sm:$0xff]
        %v319 = vld [vmem:[%s0 + $0xf0] sm:$0xff]
        %v320 = vld [vmem:[%s0 + $0xf8] sm:$0xff]
        %v321 = vld [vmem:[%s2] sm:$0xff]
        %v322 = vld [vmem:[%s2 + $0x8] sm:$0xff]
        %v323 = vld [vmem:[%s2 + $0x10] sm:$0xff]
        %v324 = vld [vmem:[%s2 + $0x18] sm:$0xff]
        %v325 = vld [vmem:[%s2 + $0x20] sm:$0xff]
        %v326 = vld [vmem:[%s2 + $0x28] sm:$0xff]
        %v327 = vld [vmem:[%s2 + $0x30] sm:$0xff]
        %v328 = vld [vmem:[%s2 + $0x38] sm:$0xff]
        %vm329 = vcmask 523264
        %v331 = vsel %vm329, %v289, 0
        %v334 = vsel %vm329, %v290, 0
        %v337 = vsel %vm329, %v291, 0
        %v340 = vsel %vm329, %v292, 0
        %v343 = vsel %vm329, %v293, 0
        %v346 = vsel %vm329, %v294, 0
        %v349 = vsel %vm329, %v295, 0
        %v352 = vsel %vm329, %v296, 0
        %v355 = vsel %vm329, %v297, 0
        %v358 = vsel %vm329, %v298, 0
        %v361 = vsel %vm329, %v299, 0
        %v364 = vsel %vm329, %v300, 0
        %v367 = vsel %vm329, %v301, 0
        %v370 = vsel %vm329, %v302, 0
        %v373 = vsel %vm329, %v303, 0
        %v376 = vsel %vm329, %v304, 0
        %v379 = vsel %vm329, %v305, 0
        %v382 = vsel %vm329, %v306, 0
        %v385 = vsel %vm329, %v307, 0
        %v388 = vsel %vm329, %v308, 0
        %v391 = vsel %vm329, %v309, 0
        %v394 = vsel %vm329, %v310, 0
        %v397 = vsel %vm329, %v311, 0
        %v400 = vsel %vm329, %v312, 0
        %v403 = vsel %vm329, %v313, 0
        %v406 = vsel %vm329, %v314, 0
        %v409 = vsel %vm329, %v315, 0
        %v412 = vsel %vm329, %v316, 0
        %v415 = vsel %vm329, %v317, 0
        %v418 = vsel %vm329, %v318, 0
        %v421 = vsel %vm329, %v319, 0
        %v424 = vsel %vm329, %v320, 0
        %426 = vmatprep.subr.mxu0 0.0
        %427 = vmatpush1.msra.mxu0 %v321
        %428 = vmatprep.subr.mxu0 0.0
        %429 = vmatpush1.msra.mxu0 %v322
        %430 = vmatprep.subr.mxu0 0.0
        %431 = vmatpush1.msra.mxu0 %v323
        %432 = vmatprep.subr.mxu0 0.0
        %433 = vmatpush1.msra.mxu0 %v324
        %434 = vmatprep.subr.mxu0 0.0
        %435 = vmatpush1.msra.mxu0 %v325
        %436 = vmatprep.subr.mxu0 0.0
        %437 = vmatpush1.msra.mxu0 %v326
        %438 = vmatprep.subr.mxu0 0.0
        %439 = vmatpush1.msra.mxu0 %v327
        %440 = vmatprep.subr.mxu0 0.0
        %441 = vmatpush1.msra.mxu0 %v328
        %442 = vmatprep.subr.mxu0 0.0
        %443 = vmatpush1.msra.mxu0 0.0
        %444 = vmatprep.subr.mxu0 0.0
        %445 = vmatpush1.msra.mxu0 0.0
        %446 = vmatprep.subr.mxu0 0.0
        %447 = vmatpush1.msra.mxu0 0.0
        %448 = vmatprep.subr.mxu0 0.0
        %449 = vmatpush1.msra.mxu0 0.0
        %450 = vmatprep.subr.mxu0 0.0
        %451 = vmatpush1.msra.mxu0 0.0
        %452 = vmatprep.subr.mxu0 0.0
        %453 = vmatpush1.msra.mxu0 0.0
        %454 = vmatprep.subr.mxu0 0.0
        %455 = vmatpush1.msra.mxu0 0.0
        %456 = vmatprep.subr.mxu0 0.0
        %457 = vmatpush1.msra.mxu0 0.0
        %458 = vmatprep.subr.mxu0 0.0
        %459 = vmatpush1.msra.mxu0 0.0
        %460 = vmatprep.subr.mxu0 0.0
        %461 = vmatpush1.msra.mxu0 0.0
        %462 = vmatprep.subr.mxu0 0.0
        %463 = vmatpush1.msra.mxu0 0.0
        %464 = vmatprep.subr.mxu0 0.0
        %465 = vmatpush1.msra.mxu0 0.0
        %466 = vmatprep.subr.mxu0 0.0
        %467 = vmatpush1.msra.mxu0 0.0
        %468 = vmatprep.subr.mxu0 0.0
        %469 = vmatpush1.msra.mxu0 0.0
        %470 = vmatprep.subr.mxu0 0.0
        %471 = vmatpush1.msra.mxu0 0.0
        %472 = vmatprep.subr.mxu0 0.0
        %473 = vmatpush1.msra.mxu0 0.0
        %474 = vmatprep.subr.mxu0 0.0
        %475 = vmatpush1.msra.mxu0 0.0
        %476 = vmatprep.subr.mxu0 0.0
        %477 = vmatpush1.msra.mxu0 0.0
        %478 = vmatprep.subr.mxu0 0.0
        %479 = vmatpush1.msra.mxu0 0.0
        %480 = vmatprep.subr.mxu0 0.0
        %481 = vmatpush1.msra.mxu0 0.0
        %482 = vmatprep.subr.mxu0 0.0
        %483 = vmatpush1.msra.mxu0 0.0
        %484 = vmatprep.subr.mxu0 0.0
        %485 = vmatpush1.msra.mxu0 0.0
        %486 = vmatprep.subr.mxu0 0.0
        %487 = vmatpush1.msra.mxu0 0.0
        %488 = vmatprep.subr.mxu0 0.0
        %489 = vmatpush1.msra.mxu0 0.0
        %490 = vmatprep.mubr.f32.mxu0 0.0
        %491 = vmatmul.mubr.f32.gmra.mrb[0].mxu0 %v331
        %v492 = vpop.f32.mrb[0].mxu0
        %v493 = vadd.f32 0.0, %v492
        %v494 = vpop.f32.mrb[0].mxu0
        %495 = vmatprep.mubr.f32.mxu0 0.0
        %496 = vmatmul.mubr.f32.gmra.mrb[0].mxu0 %v334
        %v497 = vpop.f32.mrb[0].mxu0
        %v498 = vadd.f32 0.0, %v497
        %v499 = vpop.f32.mrb[0].mxu0
        %500 = vmatprep.mubr.f32.mxu0 0.0
        %501 = vmatmul.mubr.f32.gmra.mrb[0].mxu0 %v337
        %v502 = vpop.f32.mrb[0].mxu0
        %v503 = vadd.f32 0.0, %v502
        %v504 = vpop.f32.mrb[0].mxu0
        %505 = vmatprep.mubr.f32.mxu0 0.0
        %506 = vmatmul.mubr.f32.gmra.mrb[0].mxu0 %v340
        %v507 = vpop.f32.mrb[0].mxu0
        %v508 = vadd.f32 0.0, %v507
        %v509 = vpop.f32.mrb[0].mxu0
        %510 = vmatprep.mubr.f32.mxu0 0.0
        %511 = vmatmul.mubr.f32.gmra.mrb[0].mxu0 %v343
        %v512 = vpop.f32.mrb[0].mxu0
        %v513 = vadd.f32 0.0, %v512
        %v514 = vpop.f32.mrb[0].mxu0
        %515 = vmatprep.mubr.f32.mxu0 0.0
        %516 = vmatmul.mubr.f32.gmra.mrb[0].mxu0 %v346
        %v517 = vpop.f32.mrb[0].mxu0
        %v518 = vadd.f32 0.0, %v517
        %v519 = vpop.f32.mrb[0].mxu0
        %520 = vmatprep.mubr.f32.mxu0 0.0
        %521 = vmatmul.mubr.f32.gmra.mrb[0].mxu0 %v349
        %v522 = vpop.f32.mrb[0].mxu0
        %v523 = vadd.f32 0.0, %v522
        %v524 = vpop.f32.mrb[0].mxu0
        %525 = vmatprep.mubr.f32.mxu0 0.0
        %526 = vmatmul.mubr.f32.gmra.mrb[0].mxu0 %v352
        %v527 = vpop.f32.mrb[0].mxu0
        %v528 = vadd.f32 0.0, %v527
        %v529 = vpop.f32.mrb[0].mxu0
        %530 = vmatprep.mubr.f32.mxu0 0.0
        %531 = vmatmul.mubr.f32.gmra.mrb[0].mxu0 %v355
        %v532 = vpop.f32.mrb[0].mxu0
        %v533 = vadd.f32 0.0, %v532
        %v534 = vpop.f32.mrb[0].mxu0
        %535 = vmatprep.mubr.f32.mxu0 0.0
        %536 = vmatmul.mubr.f32.gmra.mrb[0].mxu0 %v358
        %v537 = vpop.f32.mrb[0].mxu0
        %v538 = vadd.f32 0.0, %v537
        %v539 = vpop.f32.mrb[0].mxu0
        %540 = vmatprep.mubr.f32.mxu0 0.0
        %541 = vmatmul.mubr.f32.gmra.mrb[0].mxu0 %v361
        %v542 = vpop.f32.mrb[0].mxu0
        %v543 = vadd.f32 0.0, %v542
        %v544 = vpop.f32.mrb[0].mxu0
        %545 = vmatprep.mubr.f32.mxu0 0.0
        %546 = vmatmul.mubr.f32.gmra.mrb[0].mxu0 %v364
        %v547 = vpop.f32.mrb[0].mxu0
        %v548 = vadd.f32 0.0, %v547
        %v549 = vpop.f32.mrb[0].mxu0
        %550 = vmatprep.mubr.f32.mxu0 0.0
        %551 = vmatmul.mubr.f32.gmra.mrb[0].mxu0 %v367
        %v552 = vpop.f32.mrb[0].mxu0
        %v553 = vadd.f32 0.0, %v552
        %v554 = vpop.f32.mrb[0].mxu0
        %555 = vmatprep.mubr.f32.mxu0 0.0
        %556 = vmatmul.mubr.f32.gmra.mrb[0].mxu0 %v370
        %v557 = vpop.f32.mrb[0].mxu0
        %v558 = vadd.f32 0.0, %v557
        %v559 = vpop.f32.mrb[0].mxu0
        %560 = vmatprep.mubr.f32.mxu0 0.0
        %561 = vmatmul.mubr.f32.gmra.mrb[0].mxu0 %v373
        %v562 = vpop.f32.mrb[0].mxu0
        %v563 = vadd.f32 0.0, %v562
        %v564 = vpop.f32.mrb[0].mxu0
        %565 = vmatprep.mubr.f32.mxu0 0.0
        %566 = vmatmul.mubr.f32.gmra.mrb[0].mxu0 %v376
        %v567 = vpop.f32.mrb[0].mxu0
        %v568 = vadd.f32 0.0, %v567
        %v569 = vpop.f32.mrb[0].mxu0
        %570 = vmatprep.mubr.f32.mxu0 0.0
        %571 = vmatmul.mubr.f32.gmra.mrb[0].mxu0 %v379
        %v572 = vpop.f32.mrb[0].mxu0
        %v573 = vadd.f32 0.0, %v572
        %v574 = vpop.f32.mrb[0].mxu0
        %575 = vmatprep.mubr.f32.mxu0 0.0
        %576 = vmatmul.mubr.f32.gmra.mrb[0].mxu0 %v382
        %v577 = vpop.f32.mrb[0].mxu0
        %v578 = vadd.f32 0.0, %v577
        %v579 = vpop.f32.mrb[0].mxu0
        %580 = vmatprep.mubr.f32.mxu0 0.0
        %581 = vmatmul.mubr.f32.gmra.mrb[0].mxu0 %v385
        %v582 = vpop.f32.mrb[0].mxu0
        %v583 = vadd.f32 0.0, %v582
        %v584 = vpop.f32.mrb[0].mxu0
        %585 = vmatprep.mubr.f32.mxu0 0.0
        %586 = vmatmul.mubr.f32.gmra.mrb[0].mxu0 %v388
        %v587 = vpop.f32.mrb[0].mxu0
        %v588 = vadd.f32 0.0, %v587
        %v589 = vpop.f32.mrb[0].mxu0
        %590 = vmatprep.mubr.f32.mxu0 0.0
        %591 = vmatmul.mubr.f32.gmra.mrb[0].mxu0 %v391
        %v592 = vpop.f32.mrb[0].mxu0
        %v593 = vadd.f32 0.0, %v592
        %v594 = vpop.f32.mrb[0].mxu0
        %595 = vmatprep.mubr.f32.mxu0 0.0
        %596 = vmatmul.mubr.f32.gmra.mrb[0].mxu0 %v394
        %v597 = vpop.f32.mrb[0].mxu0
        %v598 = vadd.f32 0.0, %v597
        %v599 = vpop.f32.mrb[0].mxu0
        %600 = vmatprep.mubr.f32.mxu0 0.0
        %601 = vmatmul.mubr.f32.gmra.mrb[0].mxu0 %v397
        %v602 = vpop.f32.mrb[0].mxu0
        %v603 = vadd.f32 0.0, %v602
        %v604 = vpop.f32.mrb[0].mxu0
        %605 = vmatprep.mubr.f32.mxu0 0.0
        %606 = vmatmul.mubr.f32.gmra.mrb[0].mxu0 %v400
        %v607 = vpop.f32.mrb[0].mxu0
        %v608 = vadd.f32 0.0, %v607
        %v609 = vpop.f32.mrb[0].mxu0
        %610 = vmatprep.mubr.f32.mxu0 0.0
        %611 = vmatmul.mubr.f32.gmra.mrb[0].mxu0 %v403
        %v612 = vpop.f32.mrb[0].mxu0
        %v613 = vadd.f32 0.0, %v612
        %v614 = vpop.f32.mrb[0].mxu0
        %615 = vmatprep.mubr.f32.mxu0 0.0
        %616 = vmatmul.mubr.f32.gmra.mrb[0].mxu0 %v406
        %v617 = vpop.f32.mrb[0].mxu0
        %v618 = vadd.f32 0.0, %v617
        %v619 = vpop.f32.mrb[0].mxu0
        %620 = vmatprep.mubr.f32.mxu0 0.0
        %621 = vmatmul.mubr.f32.gmra.mrb[0].mxu0 %v409
        %v622 = vpop.f32.mrb[0].mxu0
        %v623 = vadd.f32 0.0, %v622
        %v624 = vpop.f32.mrb[0].mxu0
        %625 = vmatprep.mubr.f32.mxu0 0.0
        %626 = vmatmul.mubr.f32.gmra.mrb[0].mxu0 %v412
        %v627 = vpop.f32.mrb[0].mxu0
        %v628 = vadd.f32 0.0, %v627
        %v629 = vpop.f32.mrb[0].mxu0
        %630 = vmatprep.mubr.f32.mxu0 0.0
        %631 = vmatmul.mubr.f32.gmra.mrb[0].mxu0 %v415
        %v632 = vpop.f32.mrb[0].mxu0
        %v633 = vadd.f32 0.0, %v632
        %v634 = vpop.f32.mrb[0].mxu0
        %635 = vmatprep.mubr.f32.mxu0 0.0
        %636 = vmatmul.mubr.f32.gmra.mrb[0].mxu0 %v418
        %v637 = vpop.f32.mrb[0].mxu0
        %v638 = vadd.f32 0.0, %v637
        %v639 = vpop.f32.mrb[0].mxu0
        %640 = vmatprep.mubr.f32.mxu0 0.0
        %641 = vmatmul.mubr.f32.gmra.mrb[0].mxu0 %v421
        %v642 = vpop.f32.mrb[0].mxu0
        %v643 = vadd.f32 0.0, %v642
        %v644 = vpop.f32.mrb[0].mxu0
        %645 = vmatprep.mubr.f32.mxu0 0.0
        %646 = vmatmul.mubr.f32.gmra.mrb[0].mxu0 %v424
        %v647 = vpop.f32.mrb[0].mxu0
        %v648 = vadd.f32 0.0, %v647
        %v649 = vpop.f32.mrb[0].mxu0
        %650 = vdwg.mxu0
        %v651 = vld [vmem:[%s242] sm:$0xff]
        %v652 = vld [vmem:[%s242 + $0x8] sm:$0xff]
        %v653 = vld [vmem:[%s242 + $0x10] sm:$0xff]
        %v654 = vld [vmem:[%s242 + $0x18] sm:$0xff]
        %v655 = vld [vmem:[%s242 + $0x20] sm:$0xff]
        %v656 = vld [vmem:[%s242 + $0x28] sm:$0xff]
        %v657 = vld [vmem:[%s242 + $0x30] sm:$0xff]
        %v658 = vld [vmem:[%s242 + $0x38] sm:$0xff]
        %v659 = vld [vmem:[%s242 + $0x40] sm:$0xff]
        %v660 = vld [vmem:[%s242 + $0x48] sm:$0xff]
        %v661 = vld [vmem:[%s242 + $0x50] sm:$0xff]
        %v662 = vld [vmem:[%s242 + $0x58] sm:$0xff]
        %v663 = vld [vmem:[%s242 + $0x60] sm:$0xff]
        %v664 = vld [vmem:[%s242 + $0x68] sm:$0xff]
        %v665 = vld [vmem:[%s242 + $0x70] sm:$0xff]
        %v666 = vld [vmem:[%s242 + $0x78] sm:$0xff]
        %v667 = vld [vmem:[%s242 + $0x80] sm:$0xff]
        %v668 = vld [vmem:[%s242 + $0x88] sm:$0xff]
        %v669 = vld [vmem:[%s242 + $0x90] sm:$0xff]
        %v670 = vld [vmem:[%s242 + $0x98] sm:$0xff]
        %v671 = vld [vmem:[%s242 + $0xa0] sm:$0xff]
        %v672 = vld [vmem:[%s242 + $0xa8] sm:$0xff]
        %v673 = vld [vmem:[%s242 + $0xb0] sm:$0xff]
        %v674 = vld [vmem:[%s242 + $0xb8] sm:$0xff]
        %v675 = vld [vmem:[%s242 + $0xc0] sm:$0xff]
        %v676 = vld [vmem:[%s242 + $0xc8] sm:$0xff]
        %v677 = vld [vmem:[%s242 + $0xd0] sm:$0xff]
        %v678 = vld [vmem:[%s242 + $0xd8] sm:$0xff]
        %v679 = vld [vmem:[%s242 + $0xe0] sm:$0xff]
        %v680 = vld [vmem:[%s242 + $0xe8] sm:$0xff]
        %v681 = vld [vmem:[%s242 + $0xf0] sm:$0xff]
        %v682 = vld [vmem:[%s242 + $0xf8] sm:$0xff]
        %v683 = vld [vmem:[%s3] sm:$0x1]
        %v685 = vlaneseq
        %v686 = vshrl.u32 %v685, 7
        %v687 = vsub.s32 0, %v686
        %v688 = vrot.slane %v683, %v687
        %690 = vmatprep.subr.mxu0 0.0
        %691 = vmatpush1.msra.mxu0 %v493
        %692 = vmatprep.subr.mxu0 0.0
        %693 = vmatpush1.msra.mxu0 %v498
        %694 = vmatprep.subr.mxu0 0.0
        %695 = vmatpush1.msra.mxu0 %v503
        %696 = vmatprep.subr.mxu0 0.0
        %697 = vmatpush1.msra.mxu0 %v508
        %698 = vmatprep.subr.mxu0 0.0
        %699 = vmatpush1.msra.mxu0 %v513
        %700 = vmatprep.subr.mxu0 0.0
        %701 = vmatpush1.msra.mxu0 %v518
        %702 = vmatprep.subr.mxu0 0.0
        %703 = vmatpush1.msra.mxu0 %v523
        %704 = vmatprep.subr.mxu0 0.0
        %705 = vmatpush1.msra.mxu0 %v528
        %706 = vmatprep.subr.mxu0 0.0
        %707 = vmatpush1.msra.mxu0 %v533
        %708 = vmatprep.subr.mxu0 0.0
        %709 = vmatpush1.msra.mxu0 %v538
        %710 = vmatprep.subr.mxu0 0.0
        %711 = vmatpush1.msra.mxu0 %v543
        %712 = vmatprep.subr.mxu0 0.0
        %713 = vmatpush1.msra.mxu0 %v548
        %714 = vmatprep.subr.mxu0 0.0
        %715 = vmatpush1.msra.mxu0 %v553
        %716 = vmatprep.subr.mxu0 0.0
        %717 = vmatpush1.msra.mxu0 %v558
        %718 = vmatprep.subr.mxu0 0.0
        %719 = vmatpush1.msra.mxu0 %v563
        %720 = vmatprep.subr.mxu0 0.0
        %721 = vmatpush1.msra.mxu0 %v568
        %722 = vmatprep.subr.mxu0 0.0
        %723 = vmatpush1.msra.mxu0 %v573
        %724 = vmatprep.subr.mxu0 0.0
        %725 = vmatpush1.msra.mxu0 %v578
        %726 = vmatprep.subr.mxu0 0.0
        %727 = vmatpush1.msra.mxu0 %v583
        %728 = vmatprep.subr.mxu0 0.0
        %729 = vmatpush1.msra.mxu0 %v588
        %730 = vmatprep.subr.mxu0 0.0
        %731 = vmatpush1.msra.mxu0 %v593
        %732 = vmatprep.subr.mxu0 0.0
        %733 = vmatpush1.msra.mxu0 %v598
        %734 = vmatprep.subr.mxu0 0.0
        %735 = vmatpush1.msra.mxu0 %v603
        %736 = vmatprep.subr.mxu0 0.0
        %737 = vmatpush1.msra.mxu0 %v608
        %738 = vmatprep.subr.mxu0 0.0
        %739 = vmatpush1.msra.mxu0 %v613
        %740 = vmatprep.subr.mxu0 0.0
        %741 = vmatpush1.msra.mxu0 %v618
        %742 = vmatprep.subr.mxu0 0.0
        %743 = vmatpush1.msra.mxu0 %v623
        %744 = vmatprep.subr.mxu0 0.0
        %745 = vmatpush1.msra.mxu0 %v628
        %746 = vmatprep.subr.mxu0 0.0
        %747 = vmatpush1.msra.mxu0 %v633
        %748 = vmatprep.subr.mxu0 0.0
        %749 = vmatpush1.msra.mxu0 %v638
        %750 = vmatprep.subr.mxu0 0.0
        %751 = vmatpush1.msra.mxu0 %v643
        %752 = vmatprep.subr.mxu0 0.0
        %753 = vmatpush1.msra.mxu0 %v648
        %754 = vmatprep.mubr.f32.mxu0 %v652
        %755 = vmatmul.mubr.f32.gmra.mrb[0].mxu0 %v651
        %v756 = vpop.f32.mrb[0].mxu0
        %v757 = vadd.f32 %v688, %v756
        %v758 = vpop.f32.mrb[0].mxu0
        %759 = vmatprep.mubr.f32.mxu0 %v654
        %760 = vmatmul.mubr.f32.gmra.mrb[0].mxu0 %v653
        %v761 = vpop.f32.mrb[0].mxu0
        %v762 = vadd.f32 %v688, %v761
        %v763 = vpop.f32.mrb[0].mxu0
        %764 = vmatprep.mubr.f32.mxu0 %v656
        %765 = vmatmul.mubr.f32.gmra.mrb[0].mxu0 %v655
        %v766 = vpop.f32.mrb[0].mxu0
        %v767 = vadd.f32 %v688, %v766
        %v768 = vpop.f32.mrb[0].mxu0
        %769 = vmatprep.mubr.f32.mxu0 %v658
        %770 = vmatmul.mubr.f32.gmra.mrb[0].mxu0 %v657
        %v771 = vpop.f32.mrb[0].mxu0
        %v772 = vadd.f32 %v688, %v771
        %v773 = vpop.f32.mrb[0].mxu0
        %774 = vmatprep.mubr.f32.mxu0 %v660
        %775 = vmatmul.mubr.f32.gmra.mrb[0].mxu0 %v659
        %v776 = vpop.f32.mrb[0].mxu0
        %v777 = vadd.f32 %v688, %v776
        %v778 = vpop.f32.mrb[0].mxu0
        %779 = vmatprep.mubr.f32.mxu0 %v662
        %780 = vmatmul.mubr.f32.gmra.mrb[0].mxu0 %v661
        %v781 = vpop.f32.mrb[0].mxu0
        %v782 = vadd.f32 %v688, %v781
        %v783 = vpop.f32.mrb[0].mxu0
        %784 = vmatprep.mubr.f32.mxu0 %v664
        %785 = vmatmul.mubr.f32.gmra.mrb[0].mxu0 %v663
        %v786 = vpop.f32.mrb[0].mxu0
        %v787 = vadd.f32 %v688, %v786
        %v788 = vpop.f32.mrb[0].mxu0
        %789 = vmatprep.mubr.f32.mxu0 %v666
        %790 = vmatmul.mubr.f32.gmra.mrb[0].mxu0 %v665
        %v791 = vpop.f32.mrb[0].mxu0
        %v792 = vadd.f32 %v688, %v791
        %v793 = vpop.f32.mrb[0].mxu0
        %794 = vmatprep.mubr.f32.mxu0 %v668
        %795 = vmatmul.mubr.f32.gmra.mrb[0].mxu0 %v667
        %v796 = vpop.f32.mrb[0].mxu0
        %v797 = vadd.f32 %v688, %v796
        %v798 = vpop.f32.mrb[0].mxu0
        %799 = vmatprep.mubr.f32.mxu0 %v670
        %800 = vmatmul.mubr.f32.gmra.mrb[0].mxu0 %v669
        %v801 = vpop.f32.mrb[0].mxu0
        %v802 = vadd.f32 %v688, %v801
        %v803 = vpop.f32.mrb[0].mxu0
        %804 = vmatprep.mubr.f32.mxu0 %v672
        %805 = vmatmul.mubr.f32.gmra.mrb[0].mxu0 %v671
        %v806 = vpop.f32.mrb[0].mxu0
        %v807 = vadd.f32 %v688, %v806
        %v808 = vpop.f32.mrb[0].mxu0
        %809 = vmatprep.mubr.f32.mxu0 %v674
        %810 = vmatmul.mubr.f32.gmra.mrb[0].mxu0 %v673
        %v811 = vpop.f32.mrb[0].mxu0
        %v812 = vadd.f32 %v688, %v811
        %v813 = vpop.f32.mrb[0].mxu0
        %814 = vmatprep.mubr.f32.mxu0 %v676
        %815 = vmatmul.mubr.f32.gmra.mrb[0].mxu0 %v675
        %v816 = vpop.f32.mrb[0].mxu0
        %v817 = vadd.f32 %v688, %v816
        %v818 = vpop.f32.mrb[0].mxu0
        %819 = vmatprep.mubr.f32.mxu0 %v678
        %820 = vmatmul.mubr.f32.gmra.mrb[0].mxu0 %v677
        %v821 = vpop.f32.mrb[0].mxu0
        %v822 = vadd.f32 %v688, %v821
        %v823 = vpop.f32.mrb[0].mxu0
        %824 = vmatprep.mubr.f32.mxu0 %v680
        %825 = vmatmul.mubr.f32.gmra.mrb[0].mxu0 %v679
        %v826 = vpop.f32.mrb[0].mxu0
        %v827 = vadd.f32 %v688, %v826
        %v828 = vpop.f32.mrb[0].mxu0
        %829 = vmatprep.mubr.f32.mxu0 %v682
        %830 = vmatmul.mubr.f32.gmra.mrb[0].mxu0 %v681
        %v831 = vpop.f32.mrb[0].mxu0
        %v832 = vadd.f32 %v688, %v831
        %v833 = vpop.f32.mrb[0].mxu0
        %834 = vdwg.mxu0
        %vm835 = vcmask 261120
        %836 = vst.msk [vmem:[%s281] sm:$0xff] %vm835, %v757
        %837 = vst.msk [vmem:[%s281 + $0x8] sm:$0xff] %vm835, %v762
        %838 = vst.msk [vmem:[%s281 + $0x10] sm:$0xff] %vm835, %v767
        %839 = vst.msk [vmem:[%s281 + $0x18] sm:$0xff] %vm835, %v772
        %840 = vst.msk [vmem:[%s281 + $0x20] sm:$0xff] %vm835, %v777
        %841 = vst.msk [vmem:[%s281 + $0x28] sm:$0xff] %vm835, %v782
        %842 = vst.msk [vmem:[%s281 + $0x30] sm:$0xff] %vm835, %v787
        %843 = vst.msk [vmem:[%s281 + $0x38] sm:$0xff] %vm835, %v792
        %844 = vst.msk [vmem:[%s281 + $0x40] sm:$0xff] %vm835, %v797
        %845 = vst.msk [vmem:[%s281 + $0x48] sm:$0xff] %vm835, %v802
        %846 = vst.msk [vmem:[%s281 + $0x50] sm:$0xff] %vm835, %v807
        %847 = vst.msk [vmem:[%s281 + $0x58] sm:$0xff] %vm835, %v812
        %848 = vst.msk [vmem:[%s281 + $0x60] sm:$0xff] %vm835, %v817
        %849 = vst.msk [vmem:[%s281 + $0x68] sm:$0xff] %vm835, %v822
        %850 = vst.msk [vmem:[%s281 + $0x70] sm:$0xff] %vm835, %v827
        %851 = vst.msk [vmem:[%s281 + $0x78] sm:$0xff] %vm835, %v832
        %v852 = vld [vmem:[%s4] sm:$0xff]
        %v853 = vmul.f32 %v757, %v757
        %v854 = vmul.f32 %v762, %v762
        %v855 = vmul.f32 %v767, %v767
        %v856 = vmul.f32 %v772, %v772
        %v857 = vmul.f32 %v777, %v777
        %v858 = vmul.f32 %v782, %v782
        %v859 = vmul.f32 %v787, %v787
        %v860 = vmul.f32 %v792, %v792
        %v861 = vmul.f32 %v797, %v797
        %v862 = vmul.f32 %v802, %v802
        %v863 = vmul.f32 %v807, %v807
        %v864 = vmul.f32 %v812, %v812
        %v865 = vmul.f32 %v817, %v817
        %v866 = vmul.f32 %v822, %v822
        %v867 = vmul.f32 %v827, %v827
        %v868 = vmul.f32 %v832, %v832
        %v869 = vsel %vm835, %v853, 0.0
        %870 = vadd.xlane.f32.xlu0 %v869
        %v871 = vpop.xlane.xlu0 %870
        %v872 = vsel %vm835, %v854, 0.0
        %873 = vadd.xlane.f32.xlu0 %v872
        %v874 = vpop.xlane.xlu0 %873
        %v875 = vsel %vm835, %v855, 0.0
        %876 = vadd.xlane.f32.xlu0 %v875
        %v877 = vpop.xlane.xlu0 %876
        %v878 = vsel %vm835, %v856, 0.0
        %879 = vadd.xlane.f32.xlu0 %v878
        %v880 = vpop.xlane.xlu0 %879
        %v881 = vsel %vm835, %v857, 0.0
        %882 = vadd.xlane.f32.xlu0 %v881
        %v883 = vpop.xlane.xlu0 %882
        %v884 = vsel %vm835, %v858, 0.0
        %885 = vadd.xlane.f32.xlu0 %v884
        %v886 = vpop.xlane.xlu0 %885
        %v887 = vsel %vm835, %v859, 0.0
        %888 = vadd.xlane.f32.xlu0 %v887
        %v889 = vpop.xlane.xlu0 %888
        %v890 = vsel %vm835, %v860, 0.0
        %891 = vadd.xlane.f32.xlu0 %v890
        %v892 = vpop.xlane.xlu0 %891
        %v893 = vsel %vm835, %v861, 0.0
        %894 = vadd.xlane.f32.xlu0 %v893
        %v895 = vpop.xlane.xlu0 %894
        %v896 = vsel %vm835, %v862, 0.0
        %897 = vadd.xlane.f32.xlu0 %v896
        %v898 = vpop.xlane.xlu0 %897
        %v899 = vsel %vm835, %v863, 0.0
        %900 = vadd.xlane.f32.xlu0 %v899
        %v901 = vpop.xlane.xlu0 %900
        %v902 = vsel %vm835, %v864, 0.0
        %903 = vadd.xlane.f32.xlu0 %v902
        %v904 = vpop.xlane.xlu0 %903
        %v905 = vsel %vm835, %v865, 0.0
        %906 = vadd.xlane.f32.xlu0 %v905
        %v907 = vpop.xlane.xlu0 %906
        %v908 = vsel %vm835, %v866, 0.0
        %909 = vadd.xlane.f32.xlu0 %v908
        %v910 = vpop.xlane.xlu0 %909
        %v911 = vsel %vm835, %v867, 0.0
        %912 = vadd.xlane.f32.xlu0 %v911
        %v913 = vpop.xlane.xlu0 %912
        %v914 = vsel %vm835, %v868, 0.0
        %915 = vadd.xlane.f32.xlu0 %v914
        %v916 = vpop.xlane.xlu0 %915
        %v917 = vmul.f32 %v852, %v852
        %v918 = vsel %vm835, %v917, 0.0
        %919 = vadd.xlane.f32.xlu0 %v918
        %v920 = vpop.xlane.xlu0 %919
        %v922 = vsel %vm835, %v757, 0
        %v925 = vsel %vm835, %v762, 0
        %v928 = vsel %vm835, %v767, 0
        %v931 = vsel %vm835, %v772, 0
        %v934 = vsel %vm835, %v777, 0
        %v937 = vsel %vm835, %v782, 0
        %v940 = vsel %vm835, %v787, 0
        %v943 = vsel %vm835, %v792, 0
        %v946 = vsel %vm835, %v797, 0
        %v949 = vsel %vm835, %v802, 0
        %v952 = vsel %vm835, %v807, 0
        %v955 = vsel %vm835, %v812, 0
        %v958 = vsel %vm835, %v817, 0
        %v961 = vsel %vm835, %v822, 0
        %v964 = vsel %vm835, %v827, 0
        %v967 = vsel %vm835, %v832, 0
        %v970 = vsel %vm835, %v852, 0
        %972 = vmatprep.subr.mxu0 0.0
        %973 = vmatpush1.xpose.msra.mxu0 %v970
        %974 = vmatprep.subr.mxu0 0.0
        %975 = vmatpush1.xpose.msra.mxu0 0.0
        %976 = vmatprep.subr.mxu0 0.0
        %977 = vmatpush1.xpose.msra.mxu0 0.0
        %978 = vmatprep.subr.mxu0 0.0
        %979 = vmatpush1.xpose.msra.mxu0 0.0
        %980 = vmatprep.subr.mxu0 0.0
        %981 = vmatpush1.xpose.msra.mxu0 0.0
        %982 = vmatprep.subr.mxu0 0.0
        %983 = vmatpush1.xpose.msra.mxu0 0.0
        %984 = vmatprep.subr.mxu0 0.0
        %985 = vmatpush1.xpose.msra.mxu0 0.0
        %986 = vmatprep.subr.mxu0 0.0
        %987 = vmatpush1.xpose.msra.mxu0 0.0
        %988 = vmatprep.subr.mxu0 0.0
        %989 = vmatpush1.xpose.msra.mxu0 0.0
        %990 = vmatprep.subr.mxu0 0.0
        %991 = vmatpush1.xpose.msra.mxu0 0.0
        %992 = vmatprep.subr.mxu0 0.0
        %993 = vmatpush1.xpose.msra.mxu0 0.0
        %994 = vmatprep.subr.mxu0 0.0
        %995 = vmatpush1.xpose.msra.mxu0 0.0
        %996 = vmatprep.subr.mxu0 0.0
        %997 = vmatpush1.xpose.msra.mxu0 0.0
        %998 = vmatprep.subr.mxu0 0.0
        %999 = vmatpush1.xpose.msra.mxu0 0.0
        %1000 = vmatprep.subr.mxu0 0.0
        %1001 = vmatpush1.xpose.msra.mxu0 0.0
        %1002 = vmatprep.subr.mxu0 0.0
        %1003 = vmatpush1.xpose.msra.mxu0 0.0
        %1004 = vmatprep.subr.mxu0 0.0
        %1005 = vmatpush1.xpose.msra.mxu0 0.0
        %1006 = vmatprep.subr.mxu0 0.0
        %1007 = vmatpush1.xpose.msra.mxu0 0.0
        %1008 = vmatprep.subr.mxu0 0.0
        %1009 = vmatpush1.xpose.msra.mxu0 0.0
        %1010 = vmatprep.subr.mxu0 0.0
        %1011 = vmatpush1.xpose.msra.mxu0 0.0
        %1012 = vmatprep.subr.mxu0 0.0
        %1013 = vmatpush1.xpose.msra.mxu0 0.0
        %1014 = vmatprep.subr.mxu0 0.0
        %1015 = vmatpush1.xpose.msra.mxu0 0.0
        %1016 = vmatprep.subr.mxu0 0.0
        %1017 = vmatpush1.xpose.msra.mxu0 0.0
        %1018 = vmatprep.subr.mxu0 0.0
        %1019 = vmatpush1.xpose.msra.mxu0 0.0
        %1020 = vmatprep.subr.mxu0 0.0
        %1021 = vmatpush1.xpose.msra.mxu0 0.0
        %1022 = vmatprep.subr.mxu0 0.0
        %1023 = vmatpush1.xpose.msra.mxu0 0.0
        %1024 = vmatprep.subr.mxu0 0.0
        %1025 = vmatpush1.xpose.msra.mxu0 0.0
        %1026 = vmatprep.subr.mxu0 0.0
        %1027 = vmatpush1.xpose.msra.mxu0 0.0
        %1028 = vmatprep.subr.mxu0 0.0
        %1029 = vmatpush1.xpose.msra.mxu0 0.0
        %1030 = vmatprep.subr.mxu0 0.0
        %1031 = vmatpush1.xpose.msra.mxu0 0.0
        %1032 = vmatprep.subr.mxu0 0.0
        %1033 = vmatpush1.xpose.msra.mxu0 0.0
        %1034 = vmatprep.subr.mxu0 0.0
        %1035 = vmatpush1.xpose.msra.mxu0 0.0
        %1036 = vmatprep.mubr.f32.mxu0 0.0
        %1037 = vmatmul.mubr.f32.gmra.mrb[0].mxu0 %v922
        %v1038 = vpop.f32.mrb[0].mxu0
        %v1039 = vadd.f32 0.0, %v1038
        %v1040 = vpop.f32.mrb[0].mxu0
        %1041 = vmatprep.mubr.f32.mxu0 0.0
        %1042 = vmatmul.mubr.f32.gmra.mrb[0].mxu0 %v925
        %v1043 = vpop.f32.mrb[0].mxu0
        %v1044 = vadd.f32 0.0, %v1043
        %v1045 = vpop.f32.mrb[0].mxu0
        %1046 = vmatprep.mubr.f32.mxu0 0.0
        %1047 = vmatmul.mubr.f32.gmra.mrb[0].mxu0 %v928
        %v1048 = vpop.f32.mrb[0].mxu0
        %v1049 = vadd.f32 0.0, %v1048
        %v1050 = vpop.f32.mrb[0].mxu0
        %1051 = vmatprep.mubr.f32.mxu0 0.0
        %1052 = vmatmul.mubr.f32.gmra.mrb[0].mxu0 %v931
        %v1053 = vpop.f32.mrb[0].mxu0
        %v1054 = vadd.f32 0.0, %v1053
        %v1055 = vpop.f32.mrb[0].mxu0
        %1056 = vmatprep.mubr.f32.mxu0 0.0
        %1057 = vmatmul.mubr.f32.gmra.mrb[0].mxu0 %v934
        %v1058 = vpop.f32.mrb[0].mxu0
        %v1059 = vadd.f32 0.0, %v1058
        %v1060 = vpop.f32.mrb[0].mxu0
        %1061 = vmatprep.mubr.f32.mxu0 0.0
        %1062 = vmatmul.mubr.f32.gmra.mrb[0].mxu0 %v937
        %v1063 = vpop.f32.mrb[0].mxu0
        %v1064 = vadd.f32 0.0, %v1063
        %v1065 = vpop.f32.mrb[0].mxu0
        %1066 = vmatprep.mubr.f32.mxu0 0.0
        %1067 = vmatmul.mubr.f32.gmra.mrb[0].mxu0 %v940
        %v1068 = vpop.f32.mrb[0].mxu0
        %v1069 = vadd.f32 0.0, %v1068
        %v1070 = vpop.f32.mrb[0].mxu0
        %1071 = vmatprep.mubr.f32.mxu0 0.0
        %1072 = vmatmul.mubr.f32.gmra.mrb[0].mxu0 %v943
        %v1073 = vpop.f32.mrb[0].mxu0
        %v1074 = vadd.f32 0.0, %v1073
        %v1075 = vpop.f32.mrb[0].mxu0
        %1076 = vmatprep.mubr.f32.mxu0 0.0
        %1077 = vmatmul.mubr.f32.gmra.mrb[0].mxu0 %v946
        %v1078 = vpop.f32.mrb[0].mxu0
        %v1079 = vadd.f32 0.0, %v1078
        %v1080 = vpop.f32.mrb[0].mxu0
        %1081 = vmatprep.mubr.f32.mxu0 0.0
        %1082 = vmatmul.mubr.f32.gmra.mrb[0].mxu0 %v949
        %v1083 = vpop.f32.mrb[0].mxu0
        %v1084 = vadd.f32 0.0, %v1083
        %v1085 = vpop.f32.mrb[0].mxu0
        %1086 = vmatprep.mubr.f32.mxu0 0.0
        %1087 = vmatmul.mubr.f32.gmra.mrb[0].mxu0 %v952
        %v1088 = vpop.f32.mrb[0].mxu0
        %v1089 = vadd.f32 0.0, %v1088
        %v1090 = vpop.f32.mrb[0].mxu0
        %1091 = vmatprep.mubr.f32.mxu0 0.0
        %1092 = vmatmul.mubr.f32.gmra.mrb[0].mxu0 %v955
        %v1093 = vpop.f32.mrb[0].mxu0
        %v1094 = vadd.f32 0.0, %v1093
        %v1095 = vpop.f32.mrb[0].mxu0
        %1096 = vmatprep.mubr.f32.mxu0 0.0
        %1097 = vmatmul.mubr.f32.gmra.mrb[0].mxu0 %v958
        %v1098 = vpop.f32.mrb[0].mxu0
        %v1099 = vadd.f32 0.0, %v1098
        %v1100 = vpop.f32.mrb[0].mxu0
        %1101 = vmatprep.mubr.f32.mxu0 0.0
        %1102 = vmatmul.mubr.f32.gmra.mrb[0].mxu0 %v961
        %v1103 = vpop.f32.mrb[0].mxu0
        %v1104 = vadd.f32 0.0, %v1103
        %v1105 = vpop.f32.mrb[0].mxu0
        %1106 = vmatprep.mubr.f32.mxu0 0.0
        %1107 = vmatmul.mubr.f32.gmra.mrb[0].mxu0 %v964
        %v1108 = vpop.f32.mrb[0].mxu0
        %v1109 = vadd.f32 0.0, %v1108
        %v1110 = vpop.f32.mrb[0].mxu0
        %1111 = vmatprep.mubr.f32.mxu0 0.0
        %1112 = vmatmul.mubr.f32.gmra.mrb[0].mxu0 %v967
        %v1113 = vpop.f32.mrb[0].mxu0
        %v1114 = vadd.f32 0.0, %v1113
        %v1115 = vpop.f32.mrb[0].mxu0
        %1116 = vdwg.mxu0
        %v1118 = vlaneseq
        %v1119 = vand.u32 %v1118, 127
        %v1120 = vlaneseq
        %v1121 = vshrl.u32 %v1120, 7
        %v1122 = vsub.s32 %v1119, %v1121
        %v1123 = vrot.slane %v920, %v1122
        %vm1124 = vcmask 1042434
        %v1125 = vsel %vm1124, %v1123, %v1123
        %vm1126 = vcmask 1043459
        %v1127 = vsel %vm1126, %v1123, %v1125
        %vm1128 = vcmask 1044484
        %v1129 = vsel %vm1128, %v1123, %v1127
        %vm1130 = vcmask 1045509
        %v1131 = vsel %vm1130, %v1123, %v1129
        %vm1132 = vcmask 1046534
        %v1133 = vsel %vm1132, %v1123, %v1131
        %vm1134 = vcmask 1047559
        %v1135 = vsel %vm1134, %v1123, %v1133
        %v1137 = vadd.f32 %v871, %v1135
        %v1138 = vadd.f32 %v874, %v1135
        %v1139 = vadd.f32 %v877, %v1135
        %v1140 = vadd.f32 %v880, %v1135
        %v1141 = vadd.f32 %v883, %v1135
        %v1142 = vadd.f32 %v886, %v1135
        %v1143 = vadd.f32 %v889, %v1135
        %v1144 = vadd.f32 %v892, %v1135
        %v1145 = vadd.f32 %v895, %v1135
        %v1146 = vadd.f32 %v898, %v1135
        %v1147 = vadd.f32 %v901, %v1135
        %v1148 = vadd.f32 %v904, %v1135
        %v1149 = vadd.f32 %v907, %v1135
        %v1150 = vadd.f32 %v910, %v1135
        %v1151 = vadd.f32 %v913, %v1135
        %v1152 = vadd.f32 %v916, %v1135
        %v1153 = vmul.f32 %v1039, 2.0
        %v1154 = vmul.f32 %v1044, 2.0
        %v1155 = vmul.f32 %v1049, 2.0
        %v1156 = vmul.f32 %v1054, 2.0
        %v1157 = vmul.f32 %v1059, 2.0
        %v1158 = vmul.f32 %v1064, 2.0
        %v1159 = vmul.f32 %v1069, 2.0
        %v1160 = vmul.f32 %v1074, 2.0
        %v1161 = vmul.f32 %v1079, 2.0
        %v1162 = vmul.f32 %v1084, 2.0
        %v1163 = vmul.f32 %v1089, 2.0
        %v1164 = vmul.f32 %v1094, 2.0
        %v1165 = vmul.f32 %v1099, 2.0
        %v1166 = vmul.f32 %v1104, 2.0
        %v1167 = vmul.f32 %v1109, 2.0
        %v1168 = vmul.f32 %v1114, 2.0
        %v1169 = vsub.f32 %v1137, %v1153
        %v1170 = vsub.f32 %v1138, %v1154
        %v1171 = vsub.f32 %v1139, %v1155
        %v1172 = vsub.f32 %v1140, %v1156
        %v1173 = vsub.f32 %v1141, %v1157
        %v1174 = vsub.f32 %v1142, %v1158
        %v1175 = vsub.f32 %v1143, %v1159
        %v1176 = vsub.f32 %v1144, %v1160
        %v1177 = vsub.f32 %v1145, %v1161
        %v1178 = vsub.f32 %v1146, %v1162
        %v1179 = vsub.f32 %v1147, %v1163
        %v1180 = vsub.f32 %v1148, %v1164
        %v1181 = vsub.f32 %v1149, %v1165
        %v1182 = vsub.f32 %v1150, %v1166
        %v1183 = vsub.f32 %v1151, %v1167
        %v1184 = vsub.f32 %v1152, %v1168
        %v1185 = vmax.f32 %v1169, 0.0
        %v1186 = vmax.f32 %v1170, 0.0
        %v1187 = vmax.f32 %v1171, 0.0
        %v1188 = vmax.f32 %v1172, 0.0
        %v1189 = vmax.f32 %v1173, 0.0
        %v1190 = vmax.f32 %v1174, 0.0
        %v1191 = vmax.f32 %v1175, 0.0
        %v1192 = vmax.f32 %v1176, 0.0
        %v1193 = vmax.f32 %v1177, 0.0
        %v1194 = vmax.f32 %v1178, 0.0
        %v1195 = vmax.f32 %v1179, 0.0
        %v1196 = vmax.f32 %v1180, 0.0
        %v1197 = vmax.f32 %v1181, 0.0
        %v1198 = vmax.f32 %v1182, 0.0
        %v1199 = vmax.f32 %v1183, 0.0
        %v1200 = vmax.f32 %v1184, 0.0
        %v1201 = vmul.f32 %v1185, 5.0
        %v1202 = vmul.f32 %v1186, 5.0
        %v1203 = vmul.f32 %v1187, 5.0
        %v1204 = vmul.f32 %v1188, 5.0
        %v1205 = vmul.f32 %v1189, 5.0
        %v1206 = vmul.f32 %v1190, 5.0
        %v1207 = vmul.f32 %v1191, 5.0
        %v1208 = vmul.f32 %v1192, 5.0
        %v1209 = vmul.f32 %v1193, 5.0
        %v1210 = vmul.f32 %v1194, 5.0
        %v1211 = vmul.f32 %v1195, 5.0
        %v1212 = vmul.f32 %v1196, 5.0
        %v1213 = vmul.f32 %v1197, 5.0
        %v1214 = vmul.f32 %v1198, 5.0
        %v1215 = vmul.f32 %v1199, 5.0
        %v1216 = vmul.f32 %v1200, 5.0
        %v1217 = vadd.f32 %v1201, 1.0
        %v1218 = vadd.f32 %v1202, 1.0
        %v1219 = vadd.f32 %v1203, 1.0
        %v1220 = vadd.f32 %v1204, 1.0
        %v1221 = vadd.f32 %v1205, 1.0
        %v1222 = vadd.f32 %v1206, 1.0
        %v1223 = vadd.f32 %v1207, 1.0
        %v1224 = vadd.f32 %v1208, 1.0
        %v1225 = vadd.f32 %v1209, 1.0
        %v1226 = vadd.f32 %v1210, 1.0
        %v1227 = vadd.f32 %v1211, 1.0
        %v1228 = vadd.f32 %v1212, 1.0
        %v1229 = vadd.f32 %v1213, 1.0
        %v1230 = vadd.f32 %v1214, 1.0
        %v1231 = vadd.f32 %v1215, 1.0
        %v1232 = vadd.f32 %v1216, 1.0
        %v1233 = vadd.f32 %v1217, 1e-08
        %v1234 = vadd.f32 %v1218, 1e-08
        %v1235 = vadd.f32 %v1219, 1e-08
        %v1236 = vadd.f32 %v1220, 1e-08
        %v1237 = vadd.f32 %v1221, 1e-08
        %v1238 = vadd.f32 %v1222, 1e-08
        %v1239 = vadd.f32 %v1223, 1e-08
        %v1240 = vadd.f32 %v1224, 1e-08
        %v1241 = vadd.f32 %v1225, 1e-08
        %v1242 = vadd.f32 %v1226, 1e-08
        %v1243 = vadd.f32 %v1227, 1e-08
        %v1244 = vadd.f32 %v1228, 1e-08
        %v1245 = vadd.f32 %v1229, 1e-08
        %v1246 = vadd.f32 %v1230, 1e-08
        %v1247 = vadd.f32 %v1231, 1e-08
        %v1248 = vadd.f32 %v1232, 1e-08
        %v1249 = vrcp.pop %v1233
        %v1250 = vrcp.pop %v1234
        %v1251 = vrcp.pop %v1235
        %v1252 = vrcp.pop %v1236
        %v1253 = vrcp.pop %v1237
        %v1254 = vrcp.pop %v1238
        %v1255 = vrcp.pop %v1239
        %v1256 = vrcp.pop %v1240
        %v1257 = vrcp.pop %v1241
        %v1258 = vrcp.pop %v1242
        %v1259 = vrcp.pop %v1243
        %v1260 = vrcp.pop %v1244
        %v1261 = vrcp.pop %v1245
        %v1262 = vrcp.pop %v1246
        %v1263 = vrcp.pop %v1247
        %v1264 = vrcp.pop %v1248
        %v1265 = vpow.f32 %v1249, 1.2
        %v1266 = vpow.f32 %v1250, 1.2
        %v1267 = vpow.f32 %v1251, 1.2
        %v1268 = vpow.f32 %v1252, 1.2
        %v1269 = vpow.f32 %v1253, 1.2
        %v1270 = vpow.f32 %v1254, 1.2
        %v1271 = vpow.f32 %v1255, 1.2
        %v1272 = vpow.f32 %v1256, 1.2
        %v1273 = vpow.f32 %v1257, 1.2
        %v1274 = vpow.f32 %v1258, 1.2
        %v1275 = vpow.f32 %v1259, 1.2
        %v1276 = vpow.f32 %v1260, 1.2
        %v1277 = vpow.f32 %v1261, 1.2
        %v1278 = vpow.f32 %v1262, 1.2
        %v1279 = vpow.f32 %v1263, 1.2
        %v1280 = vpow.f32 %v1264, 1.2
        %vm1281 = vcmask 64512
        %v1282 = vsel %vm1281, %v1265, 0.0
        %1283 = vadd.xlane.f32.xlu0 %v1282
        %v1284 = vpop.xlane.xlu0 %1283
        %v1285 = vsel %vm1281, %v1266, 0.0
        %1286 = vadd.xlane.f32.xlu0 %v1285
        %v1287 = vpop.xlane.xlu0 %1286
        %v1288 = vsel %vm1281, %v1267, 0.0
        %1289 = vadd.xlane.f32.xlu0 %v1288
        %v1290 = vpop.xlane.xlu0 %1289
        %v1291 = vsel %vm1281, %v1268, 0.0
        %1292 = vadd.xlane.f32.xlu0 %v1291
        %v1293 = vpop.xlane.xlu0 %1292
        %v1294 = vsel %vm1281, %v1269, 0.0
        %1295 = vadd.xlane.f32.xlu0 %v1294
        %v1296 = vpop.xlane.xlu0 %1295
        %v1297 = vsel %vm1281, %v1270, 0.0
        %1298 = vadd.xlane.f32.xlu0 %v1297
        %v1299 = vpop.xlane.xlu0 %1298
        %v1300 = vsel %vm1281, %v1271, 0.0
        %1301 = vadd.xlane.f32.xlu0 %v1300
        %v1302 = vpop.xlane.xlu0 %1301
        %v1303 = vsel %vm1281, %v1272, 0.0
        %1304 = vadd.xlane.f32.xlu0 %v1303
        %v1305 = vpop.xlane.xlu0 %1304
        %v1306 = vsel %vm1281, %v1273, 0.0
        %1307 = vadd.xlane.f32.xlu0 %v1306
        %v1308 = vpop.xlane.xlu0 %1307
        %v1309 = vsel %vm1281, %v1274, 0.0
        %1310 = vadd.xlane.f32.xlu0 %v1309
        %v1311 = vpop.xlane.xlu0 %1310
        %v1312 = vsel %vm1281, %v1275, 0.0
        %1313 = vadd.xlane.f32.xlu0 %v1312
        %v1314 = vpop.xlane.xlu0 %1313
        %v1315 = vsel %vm1281, %v1276, 0.0
        %1316 = vadd.xlane.f32.xlu0 %v1315
        %v1317 = vpop.xlane.xlu0 %1316
        %v1318 = vsel %vm1281, %v1277, 0.0
        %1319 = vadd.xlane.f32.xlu0 %v1318
        %v1320 = vpop.xlane.xlu0 %1319
        %v1321 = vsel %vm1281, %v1278, 0.0
        %1322 = vadd.xlane.f32.xlu0 %v1321
        %v1323 = vpop.xlane.xlu0 %1322
        %v1324 = vsel %vm1281, %v1279, 0.0
        %1325 = vadd.xlane.f32.xlu0 %v1324
        %v1326 = vpop.xlane.xlu0 %1325
        %v1327 = vsel %vm1281, %v1280, 0.0
        %1328 = vadd.xlane.f32.xlu0 %v1327
        %v1329 = vpop.xlane.xlu0 %1328
        %v1330 = vrcp.pop %v1284
        %v1331 = vrcp.pop %v1287
        %v1332 = vrcp.pop %v1290
        %v1333 = vrcp.pop %v1293
        %v1334 = vrcp.pop %v1296
        %v1335 = vrcp.pop %v1299
        %v1336 = vrcp.pop %v1302
        %v1337 = vrcp.pop %v1305
        %v1338 = vrcp.pop %v1308
        %v1339 = vrcp.pop %v1311
        %v1340 = vrcp.pop %v1314
        %v1341 = vrcp.pop %v1317
        %v1342 = vrcp.pop %v1320
        %v1343 = vrcp.pop %v1323
        %v1344 = vrcp.pop %v1326
        %v1345 = vrcp.pop %v1329
        %v1346 = vmul.f32 %v1265, %v1330
        %v1347 = vmul.f32 %v1266, %v1331
        %v1348 = vmul.f32 %v1267, %v1332
        %v1349 = vmul.f32 %v1268, %v1333
        %v1350 = vmul.f32 %v1269, %v1334
        %v1351 = vmul.f32 %v1270, %v1335
        %v1352 = vmul.f32 %v1271, %v1336
        %v1353 = vmul.f32 %v1272, %v1337
        %v1354 = vmul.f32 %v1273, %v1338
        %v1355 = vmul.f32 %v1274, %v1339
        %v1356 = vmul.f32 %v1275, %v1340
        %v1357 = vmul.f32 %v1276, %v1341
        %v1358 = vmul.f32 %v1277, %v1342
        %v1359 = vmul.f32 %v1278, %v1343
        %v1360 = vmul.f32 %v1279, %v1344
        %v1361 = vmul.f32 %v1280, %v1345
        %1362 = vst.msk [vmem:[%s287] sm:$0xff] %vm1281, %v1346
        %1363 = vst.msk [vmem:[%s287 + $0x8] sm:$0xff] %vm1281, %v1347
        %1364 = vst.msk [vmem:[%s287 + $0x10] sm:$0xff] %vm1281, %v1348
        %1365 = vst.msk [vmem:[%s287 + $0x18] sm:$0xff] %vm1281, %v1349
        %1366 = vst.msk [vmem:[%s287 + $0x20] sm:$0xff] %vm1281, %v1350
        %1367 = vst.msk [vmem:[%s287 + $0x28] sm:$0xff] %vm1281, %v1351
        %1368 = vst.msk [vmem:[%s287 + $0x30] sm:$0xff] %vm1281, %v1352
        %1369 = vst.msk [vmem:[%s287 + $0x38] sm:$0xff] %vm1281, %v1353
        %1370 = vst.msk [vmem:[%s287 + $0x40] sm:$0xff] %vm1281, %v1354
        %1371 = vst.msk [vmem:[%s287 + $0x48] sm:$0xff] %vm1281, %v1355
        %1372 = vst.msk [vmem:[%s287 + $0x50] sm:$0xff] %vm1281, %v1356
        %1373 = vst.msk [vmem:[%s287 + $0x58] sm:$0xff] %vm1281, %v1357
        %1374 = vst.msk [vmem:[%s287 + $0x60] sm:$0xff] %vm1281, %v1358
        %1375 = vst.msk [vmem:[%s287 + $0x68] sm:$0xff] %vm1281, %v1359
        %1376 = vst.msk [vmem:[%s287 + $0x70] sm:$0xff] %vm1281, %v1360
        %1377 = vst.msk [vmem:[%s287 + $0x78] sm:$0xff] %vm1281, %v1361
        %s1378 = smul.u32 16, %s21
        %p1379 = scmp.lt.s32.totalorder %s1378, 31
        %s1380 = scalar_select %p1379, %s1378, 31
        %s1381 = smul.addr %s1380, 8
        %s1382 = scalar_lea.vmem %s5, %s1381
        %s1383 = smul.u32 16, %s21
        %p1384 = scmp.lt.s32.totalorder %s1383, 31
        %s1385 = scalar_select %p1384, %s1383, 31
        %s1386 = smul.addr %s1385, 8
        %s1387 = scalar_lea.vmem %s6, %s1386
        // Predicated region
        $region45: #{tpu_custom_call.1} parent=39 // pred_check
          %p1388 = pneg %p149
        $region46: #{tpu_custom_call.1} parent=39 // pred_check_branch
          %1390 = sbr.rel (%p1388) target = $region48
        $region47: #{tpu_custom_call.1} parent=39 // pred_region
          %s1391 = smul.u32 16, %s21
        $region48: #{tpu_custom_call.1} parent=39 // pred_fallthru
          _
        // Predicated region
        $region49: #{tpu_custom_call.1} parent=39 // pred_check
          %p1392 = pneg %p175
        $region50: #{tpu_custom_call.1} parent=39 // pred_check_branch
          %1394 = sbr.rel (%p1392) target = $region52
        $region51: #{tpu_custom_call.1} parent=39 // pred_region
          %s1395 = smul.u32 16, %s21
        $region52: #{tpu_custom_call.1} parent=39 // pred_fallthru
          _
      $region40: #{tpu_custom_call.1} parent=5 // pred_fallthru
        _
      %p1396 = scmp.le.s32.totalorder 2, %s16
      // Predicated region
      $region53: #{tpu_custom_call.1} parent=5 // pred_check
        %p1397 = pneg %p1396
      $region54: #{tpu_custom_call.1} parent=5 // pred_check_branch
        %1399 = sbr.rel (%p1397) target = $region56
      $region55: #{tpu_custom_call.1} parent=5 // pred_region
        %s1400 = ssub.s32 %s16, 2
        // Predicated region
        $region57: #{tpu_custom_call.1} parent=55 // pred_check
          %p1401 = pneg %p155
        $region58: #{tpu_custom_call.1} parent=55 // pred_check_branch
          %1403 = sbr.rel (%p1401) target = $region60
        $region59: #{tpu_custom_call.1} parent=55 // pred_region
          %s1404 = smul.u32 16, %s22
          %p1405 = scmp.lt.s32.totalorder %s1404, 31
          %s1406 = scalar_select %p1405, %s1404, 31
          %s1407 = smul.addr %s1406, 8
          %s1408 = scalar_lea.vmem %s5, %s1407
        $region60: #{tpu_custom_call.1} parent=55 // pred_fallthru
          _
        // Predicated region
        $region61: #{tpu_custom_call.1} parent=55 // pred_check
          %p1409 = pneg %p181
        $region62: #{tpu_custom_call.1} parent=55 // pred_check_branch
          %1411 = sbr.rel (%p1409) target = $region64
        $region63: #{tpu_custom_call.1} parent=55 // pred_region
          %s1412 = smul.u32 16, %s22
          %p1413 = scmp.lt.s32.totalorder %s1412, 31
          %s1414 = scalar_select %p1413, %s1412, 31
          %s1415 = smul.addr %s1414, 8
          %s1416 = scalar_lea.vmem %s6, %s1415
        $region64: #{tpu_custom_call.1} parent=55 // pred_fallthru
          _
      $region56: #{tpu_custom_call.1} parent=5 // pred_fallthru
        _
    $region6: #{tpu_custom_call.1} parent=1 // loop_footer
      %s20 = sadd.s32 1, %s16
    $region7: #{tpu_custom_call.1} parent=1 // loop_footer_branch
      %15 = sbr.rel target = $region3
    $region8: #{tpu_custom_call.1} parent=1 // loop_exit
      _
    %1417 = vsyncpa [#allocation3], 1
    %s1418 = scalar_lea.sflag [#allocation3], 1
    %1419 = vsyncpa %s1418, 1

</llo_original>
